<compile_context>
chip_gen: v6e
topology: v6e:2x2x1
jax: 0.10.0
libtpu: 0.0.40
codegen_flags: <defaults>
</compile_context>

<pallas_src>
import functools

import jax
import jax.numpy as jnp
from jax.experimental import pallas as pl
from jax.experimental.pallas import tpu as pltpu


def _round_up(n, m):
    return ((n + m - 1) // m) * m


def _qnet_kernel(x_ref, w1_ref, b1_ref, w2_ref, b2_ref, o_ref):
    # Layer 1: h = relu(x @ w1t + b1)  -- bf16 MXU matmul, f32 accumulate,
    # f32 epilogue (b1 is (1, H) and broadcasts over the batch rows).
    h = jnp.dot(x_ref[...], w1_ref[...], preferred_element_type=jnp.float32)
    h = jnp.maximum(h + b1_ref[...], 0.0)
    # Layer 2: out = h @ w2t + b2.  h is intentionally down-cast to bf16 for the
    # MXU (documented precision trade, ~1e-3 vs pure f32); accumulate stays f32.
    out = jnp.dot(h.astype(w2_ref.dtype), w2_ref[...],
                  preferred_element_type=jnp.float32)
    o_ref[...] = (out + b2_ref[...]).astype(o_ref.dtype)


def prepare_params(w1, b1, w2, b2):
    """One-time parameter prep (hoisted out of the per-step forward).

    PyTorch layout in: w1 (hidden, in), w2 (out, hidden).  Returns the padded,
    pre-transposed, bf16 tensors the kernel consumes:
      w1t (K, H) bf16, b1p (1, H) f32, w2t (H, N) bf16, b2p (1, N) f32
    with K/H/N = feature dims rounded up to 128 (lane-dense vregs / MXU tiles).
    Store these and reuse them for every forward call.
    """
    hidden, in_features = w1.shape
    out_features = w2.shape[0]
    K = _round_up(in_features, 128)
    H = _round_up(hidden, 128)
    N = _round_up(out_features, 128)

    w1t = jnp.zeros((K, H), jnp.bfloat16).at[:in_features, :hidden].set(
        w1.T.astype(jnp.bfloat16))
    b1p = jnp.zeros((1, H), jnp.float32).at[0, :hidden].set(b1.astype(jnp.float32))
    w2t = jnp.zeros((H, N), jnp.bfloat16).at[:hidden, :out_features].set(
        w2.T.astype(jnp.bfloat16))
    b2p = jnp.zeros((1, N), jnp.float32).at[0, :out_features].set(b2.astype(jnp.float32))
    return w1t, b1p, w2t, b2p


def prepare_input(x):
    """Pad the feature dim to a multiple of 128 and cast to bf16.

    Call this once where the observation / replay buffer is built so the hot
    forward path sees already lane-dense bf16 activations (no per-call pad copy).
    """
    batch, feat = x.shape
    K = _round_up(feat, 128)
    xb = x.astype(jnp.bfloat16)
    if feat == K:
        return xb
    return jnp.pad(xb, ((0, 0), (0, K - feat)))


def linear_qnet_forward(x, w1t, b1p, w2t, b2p, *, out_features, block_batch=256):
    """Forward matching PyTorch Linear_QNet: relu(x @ w1.T + b1) @ w2.T + b2.

    `w1t/b1p/w2t/b2p` come from prepare_params (padded, pre-transposed, bf16).
    `x` should ideally come from prepare_input (already bf16, K-padded); raw f32
    input is also accepted and padded here as a fallback.
    """
    K, H = w1t.shape
    N = w2t.shape[1]

    if x.shape[1] != K or x.dtype != jnp.bfloat16:
        x = prepare_input(x)  # fallback; prefer preparing upstream, once
    batch = x.shape[0]

    if batch <= block_batch:
        # Tiny-batch (inference) path: single invocation, full-array VMEM blocks,
        # no grid and no pipelining machinery at all.
        out_padded = pl.pallas_call(
            _qnet_kernel,
            out_shape=jax.ShapeDtypeStruct((batch, N), jnp.float32),
        )(x, w1t, b1p, w2t, b2p)
        return out_padded[:, :out_features]

    # Large-batch (training / replay) path: 1-D grid over the batch.  Since
    # batch > TB here, the grid has >= 2 "parallel" blocks -> megacore on v7x.
    TB = block_batch
    B = _round_up(batch, TB)
    if B != batch:
        # TODO(synk): size the replay batch as a multiple of block_batch upstream
        # to avoid this pad (padded rows are computed then sliced away).
        x = jnp.pad(x, ((0, B - batch), (0, 0)))

    const = lambda i: (0, 0)  # weights/biases: VMEM-resident across all steps
    out_padded = pl.pallas_call(
        _qnet_kernel,
        out_shape=jax.ShapeDtypeStruct((B, N), jnp.float32),
        grid=(B // TB,),
        in_specs=[
            pl.BlockSpec((TB, K), lambda i: (i, 0)),                       # x tiles
            pl.BlockSpec((K, H), const, pipeline_mode=pl.Buffered(1)),     # w1t
            pl.BlockSpec((1, H), const, pipeline_mode=pl.Buffered(1)),     # b1
            pl.BlockSpec((H, N), const, pipeline_mode=pl.Buffered(1)),     # w2t
            pl.BlockSpec((1, N), const, pipeline_mode=pl.Buffered(1)),     # b2
        ],
        out_specs=pl.BlockSpec((TB, N), lambda i: (i, 0)),
        compiler_params=pltpu.CompilerParams(
            dimension_semantics=("parallel",)),
    )(x, w1t, b1p, w2t, b2p)
    return out_padded[:batch, :out_features]


def init_params(key, input_size, hidden_size, output_size):
    """Deterministic init mimicking nn.Linear's uniform(-1/sqrt(fan_in), 1/sqrt(fan_in))."""
    k1, k2, k3, k4 = jax.random.split(key, 4)
    bound1 = 1.0 / jnp.sqrt(input_size)
    bound2 = 1.0 / jnp.sqrt(hidden_size)
    w1 = jax.random.uniform(k1, (hidden_size, input_size), jnp.float32, -bound1, bound1)
    b1 = jax.random.uniform(k2, (hidden_size,), jnp.float32, -bound1, bound1)
    w2 = jax.random.uniform(k3, (output_size, hidden_size), jnp.float32, -bound2, bound2)
    b2 = jax.random.uniform(k4, (output_size,), jnp.float32, -bound2, bound2)
    return w1, b1, w2, b2


def _reference_bf16(x, w1, b1, w2, b2):
    """Pure-JAX reference emulating the kernel's bf16-operand / f32-accumulate math."""
    xb = x.astype(jnp.bfloat16).astype(jnp.float32)
    w1b = w1.astype(jnp.bfloat16).astype(jnp.float32)
    w2b = w2.astype(jnp.bfloat16).astype(jnp.float32)
    h = jnp.maximum(xb @ w1b.T + b1, 0.0)
    return h.astype(jnp.bfloat16).astype(jnp.float32) @ w2b.T + b2


if __name__ == "__main__":
    # Small shapes consistent with the module (snake-game Q-net style sizes).
    input_size, hidden_size, output_size = 16, 32, 4

    key = jax.random.PRNGKey(0)
    kx, kx2, kp = jax.random.split(key, 3)
    w1, b1, w2, b2 = init_params(kp, input_size, hidden_size, output_size)

    # --- One-time param prep (hoisted out of the forward per perf review) ----
    w1t, b1p, w2t, b2p = prepare_params(w1, b1, w2, b2)
    qnet = jax.jit(functools.partial(linear_qnet_forward, out_features=output_size))

    # --- Tiny inference batch: no grid, single full-array VMEM block ---------
    batch = 8
    x = jax.random.normal(kx, (batch, input_size), jnp.float32)
    x_prep = prepare_input(x)                      # once, where the buffer is built
    out = jax.block_until_ready(qnet(x_prep, w1t, b1p, w2t, b2p))
    assert out.shape == (batch, output_size)
    assert jnp.allclose(out, _reference_bf16(x, w1, b1, w2, b2), atol=1e-3, rtol=1e-3)
    ref_f32 = jnp.maximum(x @ w1.T + b1, 0.0) @ w2.T + b2
    assert jnp.allclose(out, ref_f32, atol=3e-2, rtol=3e-2)

    # --- Larger replay batch: 1-D parallel grid (TB=256 -> 2 blocks) ---------
    big_batch = 512
    xb_raw = jax.random.normal(kx2, (big_batch, input_size), jnp.float32)
    xb_prep = prepare_input(xb_raw)
    out_big = jax.block_until_ready(qnet(xb_prep, w1t, b1p, w2t, b2p))
    assert out_big.shape == (big_batch, output_size)
    assert jnp.allclose(out_big, _reference_bf16(xb_raw, w1, b1, w2, b2),
                        atol=1e-3, rtol=1e-3)

    print("KERNEL_OK")
</pallas_src>

<mosaic_0001>
module attributes {stable_mosaic.version = 11 : i64} {
  func.func @_qnet_kernel(%arg0: memref<8x128xbf16, #tpu.memory_space<vmem>>, %arg1: memref<128x128xbf16, #tpu.memory_space<vmem>>, %arg2: memref<1x128xf32, #tpu.memory_space<vmem>>, %arg3: memref<128x128xbf16, #tpu.memory_space<vmem>>, %arg4: memref<1x128xf32, #tpu.memory_space<vmem>>, %arg5: memref<8x128xf32, #tpu.memory_space<vmem>>) attributes {dimension_semantics = [], scalar_prefetch = 0 : i64, scratch_operands = 0 : i64, tpu.core_type = #tpu.core_type<tc>} {
    %c0 = arith.constant 0 : index
    %c0_0 = arith.constant 0 : index
    %0 = vector.load %arg0[%c0, %c0_0] : memref<8x128xbf16, #tpu.memory_space<vmem>>, vector<8x128xbf16>
    %c0_1 = arith.constant 0 : index
    %c0_2 = arith.constant 0 : index
    %1 = vector.load %arg1[%c0_1, %c0_2] : memref<128x128xbf16, #tpu.memory_space<vmem>>, vector<128x128xbf16>
    %cst = arith.constant dense<0.000000e+00> : vector<8x128xf32>
    %2 = tpu.matmul %0, %1, %cst {dimension_numbers = #tpu.dot_dimension_numbers<[1], [0], [0], [1], [0, 0, 1, 1], [], []>} : vector<8x128xbf16>, vector<128x128xbf16>, vector<8x128xf32> -> vector<8x128xf32>
    %c0_3 = arith.constant 0 : index
    %c0_4 = arith.constant 0 : index
    %3 = vector.load %arg2[%c0_3, %c0_4] : memref<1x128xf32, #tpu.memory_space<vmem>>, vector<1x128xf32>
    %4 = vector.broadcast %3 : vector<1x128xf32> to vector<8x128xf32>
    %5 = arith.addf %2, %4 : vector<8x128xf32>
    %cst_5 = arith.constant 0.000000e+00 : f32
    %6 = vector.broadcast %cst_5 : f32 to vector<8x128xf32>
    %7 = arith.maximumf %5, %6 : vector<8x128xf32>
    %8 = arith.truncf %7 : vector<8x128xf32> to vector<8x128xbf16>
    %c0_6 = arith.constant 0 : index
    %c0_7 = arith.constant 0 : index
    %9 = vector.load %arg3[%c0_6, %c0_7] : memref<128x128xbf16, #tpu.memory_space<vmem>>, vector<128x128xbf16>
    %cst_8 = arith.constant dense<0.000000e+00> : vector<8x128xf32>
    %10 = tpu.matmul %8, %9, %cst_8 {dimension_numbers = #tpu.dot_dimension_numbers<[1], [0], [0], [1], [0, 0, 1, 1], [], []>} : vector<8x128xbf16>, vector<128x128xbf16>, vector<8x128xf32> -> vector<8x128xf32>
    %c0_9 = arith.constant 0 : index
    %c0_10 = arith.constant 0 : index
    %11 = vector.load %arg4[%c0_9, %c0_10] : memref<1x128xf32, #tpu.memory_space<vmem>>, vector<1x128xf32>
    %12 = vector.broadcast %11 : vector<1x128xf32> to vector<8x128xf32>
    %13 = arith.addf %10, %12 : vector<8x128xf32>
    %c0_11 = arith.constant 0 : index
    %c0_12 = arith.constant 0 : index
    %14 = vector.load %arg5[%c0_11, %c0_12] : memref<8x128xf32, #tpu.memory_space<vmem>>, vector<8x128xf32>
    tpu.vector_store %arg5[%c0_11, %c0_12], %13 {strides = array<i32>} : memref<8x128xf32, #tpu.memory_space<vmem>>, vector<8x128xf32>,
    return
  }
}

</mosaic_0001>

<llo_original>
// kernel: linear_qnet_forward.1
$region0: #{linear_qnet_forward.1}
  #allocation0 [shape = 'u32[]', space=smem, size = 0x4, offset = 0x4, fixed_abs, tag = 'smem constant byte address 0x4 - core index']
  #allocation1 [shape = 'u32[144,128]{1,0:T(1,128)}', space=vmem, size = 0x12000, scoped, tag = 'internal scratch']
  %s0 = inlined_call_operand.hbm [shape: bf16[8,128], index: 0, kind: input, shape index: {}]
  %s1 = inlined_call_operand.hbm [shape: bf16[128,128], index: 1, kind: input, shape index: {}]
  %s2 = inlined_call_operand.vmem [shape: f32[1,128], index: 2, kind: input, shape index: {}]
  %s3 = inlined_call_operand.hbm [shape: bf16[128,128], index: 3, kind: input, shape index: {}]
  %s4 = inlined_call_operand.vmem [shape: f32[1,128], index: 4, kind: input, shape index: {}]
  %s5 = inlined_call_operand.vmem [shape: f32[8,128], index: 5, kind: output, shape index: {}]
  %s6 = sld [smem:[#allocation0]]
  $region42: #{linear_qnet_forward.1} parent=0
    _
  %s8 = ssub.s32 1, %s6
  %s9 = scalar_select 0, %s8, %s6
  $region1: #{linear_qnet_forward.1} parent=0
    #allocation2 [shape = 'u8[2048]{0}', space=vmem, size = 0x800, scoped, tag = 'input window, operand 0, single buffered']
    #allocation3 [shape = 's32[1]{0}', space=sflag, size = 0x4, scoped, tag = 'scoped memory for linear_qnet_forward.1']
    #allocation4 [shape = 'u8[32768]{0}', space=vmem, size = 0x8000, scoped, tag = 'input window, operand 1, single buffered']
    #allocation5 [shape = 's32[1]{0}', space=sflag, size = 0x4, scoped, tag = 'scoped memory for linear_qnet_forward.1']
    #allocation6 [shape = 'u8[32768]{0}', space=vmem, size = 0x8000, scoped, tag = 'input window, operand 3, single buffered']
    %10 = vsyncpa [#allocation3], 0
    %11 = vsyncpa [#allocation5], 0
    // Predicated region
    $region2: #{linear_qnet_forward.1} parent=1 // pred_check
      _
    $region3: #{linear_qnet_forward.1} parent=1 // pred_check_branch
      %13 = sbr.rel (0) target = $region5
    $region4: #{linear_qnet_forward.1} parent=1 // pred_region
      %s15 = ssub.s32 64, 64
      %16 = vsyncadd [#allocation3], %s15
      %s18 = sshll.u32 [#allocation2], 4
      %s19 = int_to_ptr.vmem [resolvable:$true] %s18
      %21 = dma.hbm_to_vmem [thread:$0]  %s0, 64, %s19, [#allocation3]
    $region5: #{linear_qnet_forward.1} parent=1 // pred_fallthru
      _
    // Predicated region
    $region6: #{linear_qnet_forward.1} parent=1 // pred_check
      _
    $region7: #{linear_qnet_forward.1} parent=1 // pred_check_branch
      %23 = sbr.rel (0) target = $region9
    $region8: #{linear_qnet_forward.1} parent=1 // pred_region
      %s25 = ssub.s32 1024, 1024
      %26 = vsyncadd [#allocation5], %s25
      %s27 = sshll.u32 [#allocation4], 4
      %s28 = int_to_ptr.vmem [resolvable:$true] %s27
      %33 = dma.hbm_to_vmem [thread:$0]  %s1, 1024, %s28, [#allocation5], 64, 64, 4
    $region9: #{linear_qnet_forward.1} parent=1 // pred_fallthru
      _
    // Predicated region
    $region10: #{linear_qnet_forward.1} parent=1 // pred_check
      _
    $region11: #{linear_qnet_forward.1} parent=1 // pred_check_branch
      %35 = sbr.rel (0) target = $region13
    $region12: #{linear_qnet_forward.1} parent=1 // pred_region
      _
    $region13: #{linear_qnet_forward.1} parent=1 // pred_fallthru
      _
    // Predicated region
    $region14: #{linear_qnet_forward.1} parent=1 // pred_check
      _
    $region15: #{linear_qnet_forward.1} parent=1 // pred_check_branch
      %37 = sbr.rel (0) target = $region17
    $region16: #{linear_qnet_forward.1} parent=1 // pred_region
      %s39 = ssub.s32 1024, 1024
      %40 = vsyncadd [#allocation5], %s39
      %s41 = sshll.u32 [#allocation6], 4
      %s42 = int_to_ptr.vmem [resolvable:$true] %s41
      %47 = dma.hbm_to_vmem [thread:$0]  %s3, 1024, %s42, [#allocation5], 64, 64, 4
    $region17: #{linear_qnet_forward.1} parent=1 // pred_fallthru
      _
    // Predicated region
    $region18: #{linear_qnet_forward.1} parent=1 // pred_check
      _
    $region19: #{linear_qnet_forward.1} parent=1 // pred_check_branch
      %49 = sbr.rel (0) target = $region21
    $region20: #{linear_qnet_forward.1} parent=1 // pred_region
      _
    $region21: #{linear_qnet_forward.1} parent=1 // pred_fallthru
      _
    // Predicated region
    $region22: #{linear_qnet_forward.1} parent=1 // pred_check
      _
    $region23: #{linear_qnet_forward.1} parent=1 // pred_check_branch
      %51 = sbr.rel (0) target = $region25
    $region24: #{linear_qnet_forward.1} parent=1 // pred_region
      %52 = dma.done [#allocation3], 64
    $region25: #{linear_qnet_forward.1} parent=1 // pred_fallthru
      _
    // Predicated region
    $region26: #{linear_qnet_forward.1} parent=1 // pred_check
      _
    $region27: #{linear_qnet_forward.1} parent=1 // pred_check_branch
      %54 = sbr.rel (0) target = $region29
    $region28: #{linear_qnet_forward.1} parent=1 // pred_region
      %55 = dma.done [#allocation5], 1024
    $region29: #{linear_qnet_forward.1} parent=1 // pred_fallthru
      _
    // Predicated region
    $region30: #{linear_qnet_forward.1} parent=1 // pred_check
      _
    $region31: #{linear_qnet_forward.1} parent=1 // pred_check_branch
      %57 = sbr.rel (0) target = $region33
    $region32: #{linear_qnet_forward.1} parent=1 // pred_region
      %58 = dma.done [#allocation5], 1024
    $region33: #{linear_qnet_forward.1} parent=1 // pred_fallthru
      _
    %v60 = vld [vmem:[#allocation2] sm:$0xf]
    %v61 = vld [vmem:[#allocation4] sm:$0xf]
    %v62 = vld [vmem:[#allocation4 + $0x4] sm:$0xf]
    %v63 = vld [vmem:[#allocation4 + $0x8] sm:$0xf]
    %v64 = vld [vmem:[#allocation4 + $0xc] sm:$0xf]
    %v65 = vld [vmem:[#allocation4 + $0x10] sm:$0xf]
    %v66 = vld [vmem:[#allocation4 + $0x14] sm:$0xf]
    %v67 = vld [vmem:[#allocation4 + $0x18] sm:$0xf]
    %v68 = vld [vmem:[#allocation4 + $0x1c] sm:$0xf]
    %v69 = vld [vmem:[#allocation4 + $0x20] sm:$0xf]
    %v70 = vld [vmem:[#allocation4 + $0x24] sm:$0xf]
    %v71 = vld [vmem:[#allocation4 + $0x28] sm:$0xf]
    %v72 = vld [vmem:[#allocation4 + $0x2c] sm:$0xf]
    %v73 = vld [vmem:[#allocation4 + $0x30] sm:$0xf]
    %v74 = vld [vmem:[#allocation4 + $0x34] sm:$0xf]
    %v75 = vld [vmem:[#allocation4 + $0x38] sm:$0xf]
    %v76 = vld [vmem:[#allocation4 + $0x3c] sm:$0xf]
    %v77 = vld [vmem:[%s2] sm:$0x1]
    %v79 = vlaneseq
    %v80 = vshrl.u32 %v79, 7
    %v81 = vsub.s32 0, %v80
    %v82 = vrot.slane %v77, %v81
    %v100 = vunpack.c.l.b16 %v61
    %v101 = vunpack.c.l.b16 %v62
    %v102 = vunpack.c.l.b16 %v63
    %v103 = vunpack.c.l.b16 %v64
    %v104 = vunpack.c.l.b16 %v65
    %v105 = vunpack.c.l.b16 %v66
    %v106 = vunpack.c.l.b16 %v67
    %v107 = vunpack.c.l.b16 %v68
    %v108 = vunpack.c.l.b16 %v69
    %v109 = vunpack.c.l.b16 %v70
    %v110 = vunpack.c.l.b16 %v71
    %v111 = vunpack.c.l.b16 %v72
    %v112 = vunpack.c.l.b16 %v73
    %v113 = vunpack.c.l.b16 %v74
    %v114 = vunpack.c.l.b16 %v75
    %v115 = vunpack.c.l.b16 %v76
    %v116 = vpack.c.b16 %v101, %v100
    %v117 = vpack.c.b16 %v103, %v102
    %v118 = vpack.c.b16 %v105, %v104
    %v119 = vpack.c.b16 %v107, %v106
    %v120 = vpack.c.b16 %v109, %v108
    %v121 = vpack.c.b16 %v111, %v110
    %v122 = vpack.c.b16 %v113, %v112
    %v123 = vpack.c.b16 %v115, %v114
    %132 = vmatprep.subr.bf16.mxu0 0
    %133 = vmatpush1.bf16.msra.mxu0 %v123
    %134 = vmatprep.subr.bf16.mxu0 0
    %135 = vmatpush1.bf16.msra.mxu0 %v122
    %136 = vmatprep.subr.bf16.mxu0 0
    %137 = vmatpush1.bf16.msra.mxu0 %v121
    %138 = vmatprep.subr.bf16.mxu0 0
    %139 = vmatpush1.bf16.msra.mxu0 %v120
    %140 = vmatprep.subr.bf16.mxu0 0
    %141 = vmatpush1.bf16.msra.mxu0 %v119
    %142 = vmatprep.subr.bf16.mxu0 0
    %143 = vmatpush1.bf16.msra.mxu0 %v118
    %144 = vmatprep.subr.bf16.mxu0 0
    %145 = vmatpush1.bf16.msra.mxu0 %v117
    %146 = vmatprep.subr.bf16.mxu0 0
    %147 = vmatpush1.bf16.msra.mxu0 %v116
    %148 = vmatprep.subr.bf16.mxu0 0
    %149 = vmatpush2.bf16.msra.mxu0 0
    %150 = vmatprep.subr.bf16.mxu0 0
    %151 = vmatpush2.bf16.msra.mxu0 0
    %152 = vmatprep.subr.bf16.mxu0 0
    %153 = vmatpush2.bf16.msra.mxu0 0
    %154 = vmatprep.subr.bf16.mxu0 0
    %155 = vmatpush2.bf16.msra.mxu0 0
    %156 = vmatprep.subr.bf16.mxu0 0
    %157 = vmatpush2.bf16.msra.mxu0 0
    %158 = vmatprep.subr.bf16.mxu0 0
    %159 = vmatpush2.bf16.msra.mxu0 0
    %160 = vmatprep.subr.bf16.mxu0 0
    %161 = vmatpush2.bf16.msra.mxu0 0
    %162 = vmatprep.subr.bf16.mxu0 0
    %163 = vmatpush2.bf16.msra.mxu0 0
    %164 = vmatprep.mubr.bf16.mxu0 0
    %165 = vmatmul.mubr.bf16.gmra.mxu0 %v60
    %v166 = vpop.f32.mrf.mxu0
    %v167 = vadd.f32 %v82, %v166
    %v168 = vpop.f32.mrf.mxu0
    %v169 = vpop.f32.mrf.mxu0
    %v170 = vpop.f32.mrf.mxu0
    %171 = vdwg.mxu0
    %v172 = vmax.f32 %v167, 0.0
    %v173 = vpack.c.bf16 %v172, %v172
    %v174 = vld [vmem:[#allocation6] sm:$0xf]
    %v175 = vld [vmem:[#allocation6 + $0x4] sm:$0xf]
    %v176 = vld [vmem:[#allocation6 + $0x8] sm:$0xf]
    %v177 = vld [vmem:[#allocation6 + $0xc] sm:$0xf]
    %v178 = vld [vmem:[#allocation6 + $0x10] sm:$0xf]
    %v179 = vld [vmem:[#allocation6 + $0x14] sm:$0xf]
    %v180 = vld [vmem:[#allocation6 + $0x18] sm:$0xf]
    %v181 = vld [vmem:[#allocation6 + $0x1c] sm:$0xf]
    %v182 = vld [vmem:[#allocation6 + $0x20] sm:$0xf]
    %v183 = vld [vmem:[#allocation6 + $0x24] sm:$0xf]
    %v184 = vld [vmem:[#allocation6 + $0x28] sm:$0xf]
    %v185 = vld [vmem:[#allocation6 + $0x2c] sm:$0xf]
    %v186 = vld [vmem:[#allocation6 + $0x30] sm:$0xf]
    %v187 = vld [vmem:[#allocation6 + $0x34] sm:$0xf]
    %v188 = vld [vmem:[#allocation6 + $0x38] sm:$0xf]
    %v189 = vld [vmem:[#allocation6 + $0x3c] sm:$0xf]
    %v190 = vld [vmem:[%s4] sm:$0x1]
    %v192 = vlaneseq
    %v193 = vshrl.u32 %v192, 7
    %v194 = vsub.s32 0, %v193
    %v195 = vrot.slane %v190, %v194
    %v213 = vunpack.c.l.b16 %v174
    %v214 = vunpack.c.l.b16 %v175
    %v215 = vunpack.c.l.b16 %v176
    %v216 = vunpack.c.l.b16 %v177
    %v217 = vunpack.c.l.b16 %v178
    %v218 = vunpack.c.l.b16 %v179
    %v219 = vunpack.c.l.b16 %v180
    %v220 = vunpack.c.l.b16 %v181
    %v221 = vunpack.c.l.b16 %v182
    %v222 = vunpack.c.l.b16 %v183
    %v223 = vunpack.c.l.b16 %v184
    %v224 = vunpack.c.l.b16 %v185
    %v225 = vunpack.c.l.b16 %v186
    %v226 = vunpack.c.l.b16 %v187
    %v227 = vunpack.c.l.b16 %v188
    %v228 = vunpack.c.l.b16 %v189
    %v229 = vpack.c.b16 %v214, %v213
    %v230 = vpack.c.b16 %v216, %v215
    %v231 = vpack.c.b16 %v218, %v217
    %v232 = vpack.c.b16 %v220, %v219
    %v233 = vpack.c.b16 %v222, %v221
    %v234 = vpack.c.b16 %v224, %v223
    %v235 = vpack.c.b16 %v226, %v225
    %v236 = vpack.c.b16 %v228, %v227
    %245 = vmatprep.subr.bf16.mxu0 0
    %246 = vmatpush1.bf16.msra.mxu0 %v236
    %247 = vmatprep.subr.bf16.mxu0 0
    %248 = vmatpush1.bf16.msra.mxu0 %v235
    %249 = vmatprep.subr.bf16.mxu0 0
    %250 = vmatpush1.bf16.msra.mxu0 %v234
    %251 = vmatprep.subr.bf16.mxu0 0
    %252 = vmatpush1.bf16.msra.mxu0 %v233
    %253 = vmatprep.subr.bf16.mxu0 0
    %254 = vmatpush1.bf16.msra.mxu0 %v232
    %255 = vmatprep.subr.bf16.mxu0 0
    %256 = vmatpush1.bf16.msra.mxu0 %v231
    %257 = vmatprep.subr.bf16.mxu0 0
    %258 = vmatpush1.bf16.msra.mxu0 %v230
    %259 = vmatprep.subr.bf16.mxu0 0
    %260 = vmatpush1.bf16.msra.mxu0 %v229
    %261 = vmatprep.subr.bf16.mxu0 0
    %262 = vmatpush2.bf16.msra.mxu0 0
    %263 = vmatprep.subr.bf16.mxu0 0
    %264 = vmatpush2.bf16.msra.mxu0 0
    %265 = vmatprep.subr.bf16.mxu0 0
    %266 = vmatpush2.bf16.msra.mxu0 0
    %267 = vmatprep.subr.bf16.mxu0 0
    %268 = vmatpush2.bf16.msra.mxu0 0
    %269 = vmatprep.subr.bf16.mxu0 0
    %270 = vmatpush2.bf16.msra.mxu0 0
    %271 = vmatprep.subr.bf16.mxu0 0
    %272 = vmatpush2.bf16.msra.mxu0 0
    %273 = vmatprep.subr.bf16.mxu0 0
    %274 = vmatpush2.bf16.msra.mxu0 0
    %275 = vmatprep.subr.bf16.mxu0 0
    %276 = vmatpush2.bf16.msra.mxu0 0
    %277 = vmatprep.mubr.bf16.mxu0 0
    %278 = vmatmul.mubr.bf16.gmra.mxu0 %v173
    %v279 = vpop.f32.mrf.mxu0
    %v280 = vadd.f32 %v195, %v279
    %v281 = vpop.f32.mrf.mxu0
    %v282 = vpop.f32.mrf.mxu0
    %v283 = vpop.f32.mrf.mxu0
    %284 = vdwg.mxu0
    %285 = vst [vmem:[%s5] sm:$0xff] %v280
    // Predicated region
    $region34: #{linear_qnet_forward.1} parent=1 // pred_check
      _
    $region35: #{linear_qnet_forward.1} parent=1 // pred_check_branch
      %287 = sbr.rel (0) target = $region37
    $region36: #{linear_qnet_forward.1} parent=1 // pred_region
      _
    $region37: #{linear_qnet_forward.1} parent=1 // pred_fallthru
      _
    // Predicated region
    $region38: #{linear_qnet_forward.1} parent=1 // pred_check
      _
    $region39: #{linear_qnet_forward.1} parent=1 // pred_check_branch
      %289 = sbr.rel (0) target = $region41
    $region40: #{linear_qnet_forward.1} parent=1 // pred_region
      _
    $region41: #{linear_qnet_forward.1} parent=1 // pred_fallthru
      _
    %290 = vsyncpa [#allocation3], 1
    %291 = vsyncpa [#allocation5], 1

</llo_original>
